<compile_context>
chip_gen: v7x
topology: tpu7x:2x2x1
jax: 0.10.0
libtpu: 0.0.40
codegen_flags: <defaults>
</compile_context>

<pallas_src>
import functools

import jax
import jax.numpy as jnp
from jax import lax
from jax.experimental import pallas as pl
from jax.experimental.pallas import tpu as pltpu


# ----------------------------------------------------------------------------
# Kernels
# ----------------------------------------------------------------------------
def _modulation_kernel(temb_ref, w_ref, b_ref, out_ref):
    # temb_ref: (B, C) [whole], w_ref: (TN, C) tile of the (6E, C) torch weight,
    # b_ref: (1, TN) bias tile, out_ref: (B, TN)
    t = temb_ref[...].astype(jnp.float32)
    silu = t * jax.nn.sigmoid(t)                      # tiny; recomputed per tile
    # Contract on the weight's second (C) axis -> silu @ W^T without ever
    # materializing a transposed copy of the weight in HBM.
    acc = lax.dot_general(
        silu,
        w_ref[...].astype(jnp.float32),
        dimension_numbers=(((1,), (1,)), ((), ())),
        preferred_element_type=jnp.float32,
    ) + b_ref[...].astype(jnp.float32)
    out_ref[...] = acc.astype(out_ref.dtype)


def _ln_modulate_kernel(
    x_ref, mod_ref, ln_w_ref, ln_b_ref, out_ref, *, eps, shift_idx, scale_idx
):
    # x_ref: (1, TS, E); mod_ref: (1, 6, E) modulation row for this batch;
    # ln_w_ref / ln_b_ref: (1, E) LayerNorm affine params.
    x = x_ref[...].astype(jnp.float32)
    mean = jnp.mean(x, axis=-1, keepdims=True)
    xc = x - mean
    var = jnp.mean(xc * xc, axis=-1, keepdims=True)
    inv = lax.rsqrt(var + eps)

    m = mod_ref[...].astype(jnp.float32)               # (1, 6, E), tiny
    scale = m[:, scale_idx : scale_idx + 1, :]         # (1, 1, E)
    shift = m[:, shift_idx : shift_idx + 1, :]         # (1, 1, E)
    one_plus = 1.0 + scale
    w = ln_w_ref[...].astype(jnp.float32)[:, None, :]  # (1, 1, E)
    b = ln_b_ref[...].astype(jnp.float32)[:, None, :]  # (1, 1, E)
    scale_eff = w * one_plus                           # fold LN affine + adaLN
    shift_eff = b * one_plus + shift

    out_ref[...] = (xc * inv * scale_eff + shift_eff).astype(out_ref.dtype)


# ----------------------------------------------------------------------------
# Tile-size helpers (VMEM-aware; safe on v5e/v6e/v7x)
# ----------------------------------------------------------------------------
def _pick_seq_tile(S, E):
    """Sequence tile for the LN kernel: ~6 MiB of f32 per input tile max."""
    max_tile_bytes = 6 * 1024 * 1024
    cap = max(8, min(1024, max_tile_bytes // (E * 4)))
    cap = max(8, (cap // 8) * 8)
    if S <= cap:
        return S                       # full axis -> always a legal block
    for ts in range(cap, 7, -8):       # prefer an evenly-dividing multiple of 8
        if S % ts == 0:
            return ts
    return cap                         # ragged last tile handled by Pallas


def _pick_mod_tile(N):
    """Output tile (along 6E) for the modulation matmul."""
    if N <= 2048:
        return N                       # full axis
    for tn in range(2048, 127, -128):  # multiple of 128 that divides N
        if N % tn == 0:
            return tn
    return 2048                        # ragged last tile handled by Pallas


# ----------------------------------------------------------------------------
# Wrapper
# ----------------------------------------------------------------------------
def cogvideox_layernorm_zero(
    hidden_states, encoder_hidden_states, temb, linear_w, linear_b, ln_w, ln_b, eps=1e-5
):
    B, S, E = hidden_states.shape
    C = temb.shape[-1]
    N = 6 * E

    # --- Linear(silu(temb)) -> (B, 6E), streamed over the 6E dimension -------
    TN = _pick_mod_tile(N)
    mod = pl.pallas_call(
        _modulation_kernel,
        out_shape=jax.ShapeDtypeStruct((B, N), temb.dtype),
        grid=(pl.cdiv(N, TN),),
        in_specs=[
            pl.BlockSpec((B, C), lambda j: (0, 0)),      # temb, whole (tiny)
            pl.BlockSpec((TN, C), lambda j: (j, 0)),     # weight tile (torch layout)
            pl.BlockSpec((1, TN), lambda j: (0, j)),     # bias tile
        ],
        out_specs=pl.BlockSpec((B, TN), lambda j: (0, j)),
        compiler_params=pltpu.CompilerParams(
            dimension_semantics=("parallel",),
            vmem_limit_bytes=32 * 1024 * 1024,
        ),
    )(temb, linear_w, linear_b[None, :])

    # (B, 6E) -> (B, 6, E): chunks [shift, scale, gate, e_shift, e_scale, e_gate]
    mod3 = mod.reshape(B, 6, E)

    # LayerNorm affine params as 2-D rows (handles elementwise_affine=False too).
    if ln_w is None:
        ln_w2 = jnp.ones((1, E), dtype=jnp.float32)
    else:
        ln_w2 = ln_w.reshape(1, E)
    if ln_b is None:
        ln_b2 = jnp.zeros((1, E), dtype=jnp.float32)
    else:
        ln_b2 = ln_b.reshape(1, E)

    def run_ln(x, shift_idx, scale_idx):
        Bx, Sx, Ex = x.shape
        TS = _pick_seq_tile(Sx, Ex)
        kern = functools.partial(
            _ln_modulate_kernel, eps=eps, shift_idx=shift_idx, scale_idx=scale_idx
        )
        return pl.pallas_call(
            kern,
            out_shape=jax.ShapeDtypeStruct((Bx, Sx, Ex), x.dtype),
            grid=(Bx, pl.cdiv(Sx, TS)),
            in_specs=[
                pl.BlockSpec((1, TS, Ex), lambda b, s: (b, s, 0)),   # x tile
                pl.BlockSpec((1, 6, Ex), lambda b, s: (b, 0, 0)),    # per-batch mod row
                pl.BlockSpec((1, Ex), lambda b, s: (0, 0)),          # ln weight
                pl.BlockSpec((1, Ex), lambda b, s: (0, 0)),          # ln bias
            ],
            out_specs=pl.BlockSpec((1, TS, Ex), lambda b, s: (b, s, 0)),
            compiler_params=pltpu.CompilerParams(
                dimension_semantics=("parallel", "parallel"),
                vmem_limit_bytes=48 * 1024 * 1024,
            ),
        )(x, mod3, ln_w2, ln_b2)

    h_out = run_ln(hidden_states, shift_idx=0, scale_idx=1)
    e_out = run_ln(encoder_hidden_states, shift_idx=3, scale_idx=4)

    gate3 = mod3[:, 2:3, :]        # (B, 1, E) == gate[:, None, :]
    e_gate3 = mod3[:, 5:6, :]      # (B, 1, E) == enc_gate[:, None, :]
    return h_out, e_out, gate3, e_gate3


# ----------------------------------------------------------------------------
# Pure-JAX reference and self-test
# ----------------------------------------------------------------------------
def _reference(hidden, enc, temb, w, b, ln_w, ln_b, eps=1e-5):
    silu = temb * jax.nn.sigmoid(temb)
    mod = silu @ w.T + b
    E = hidden.shape[-1]
    shift, scale, gate, e_shift, e_scale, e_gate = [
        mod[:, i * E : (i + 1) * E] for i in range(6)
    ]

    def ln(x):
        mean = jnp.mean(x, axis=-1, keepdims=True)
        var = jnp.mean((x - mean) ** 2, axis=-1, keepdims=True)
        return (x - mean) * lax.rsqrt(var + eps) * ln_w + ln_b

    h = ln(hidden) * (1 + scale)[:, None, :] + shift[:, None, :]
    e = ln(enc) * (1 + e_scale)[:, None, :] + e_shift[:, None, :]
    return h, e, gate[:, None, :], e_gate[:, None, :]


if __name__ == "__main__":
    B, C, E = 2, 32, 128         # batch, conditioning_dim, embedding_dim
    S, S_ENC = 64, 32            # seq lengths for hidden / encoder_hidden

    key = jax.random.PRNGKey(0)
    k1, k2, k3, k4, k5 = jax.random.split(key, 5)

    hidden = jax.random.normal(k1, (B, S, E), dtype=jnp.float32)
    enc_hidden = jax.random.normal(k2, (B, S_ENC, E), dtype=jnp.float32)
    temb = jax.random.normal(k3, (B, C), dtype=jnp.float32)

    # nn.Linear(C, 6E, bias=True) weight in torch layout (6E, C); nn.LayerNorm(E)
    linear_w = 0.02 * jax.random.normal(k4, (6 * E, C), dtype=jnp.float32)
    linear_b = 0.01 * jax.random.normal(k5, (6 * E,), dtype=jnp.float32)
    ln_w = jnp.ones((E,), dtype=jnp.float32)
    ln_b = jnp.zeros((E,), dtype=jnp.float32)

    outs = cogvideox_layernorm_zero(
        hidden, enc_hidden, temb, linear_w, linear_b, ln_w, ln_b
    )
    outs = jax.block_until_ready(outs)

    refs = _reference(hidden, enc_hidden, temb, linear_w, linear_b, ln_w, ln_b)
    for o, r in zip(outs, refs):
        assert o.shape == r.shape, (o.shape, r.shape)
        assert jnp.allclose(o, r, atol=2e-4, rtol=2e-4)

    print("KERNEL_OK")
</pallas_src>

<mosaic_0001>
module attributes {stable_mosaic.version = 11 : i64} {
  func.func @_modulation_kernel(%arg0: i32, %arg1: memref<2x32xf32, #tpu.memory_space<vmem>>, %arg2: memref<768x32xf32, #tpu.memory_space<vmem>>, %arg3: memref<1x768xf32, #tpu.memory_space<vmem>>, %arg4: memref<2x768xf32, #tpu.memory_space<vmem>>) attributes {dimension_semantics = [#tpu.dimension_semantics<parallel>], iteration_bounds = array<i64: 1>, scalar_prefetch = 0 : i64, scratch_operands = 0 : i64, tpu.core_type = #tpu.core_type<tc>, window_params = [{pipeline_mode = #tpu.pipeline_mode<synchronous>, transform_indices = @transform_0, window_bounds = array<i64: 2, 32>}, {transform_indices = @transform_1, window_bounds = array<i64: 768, 32>}, {transform_indices = @transform_2, window_bounds = array<i64: 1, 768>}, {transform_indices = @transform_3, window_bounds = array<i64: 2, 768>}]} {
    %c0 = arith.constant 0 : index
    %c0_0 = arith.constant 0 : index
    %0 = vector.load %arg1[%c0, %c0_0] : memref<2x32xf32, #tpu.memory_space<vmem>>, vector<2x32xf32>
    %1 = arith.negf %0 : vector<2x32xf32>
    %2 = math.exp %1 : vector<2x32xf32>
    %cst = arith.constant 1.000000e+00 : f32
    %3 = vector.broadcast %cst : f32 to vector<2x32xf32>
    %4 = arith.addf %3, %2 : vector<2x32xf32>
    %5 = arith.divf %3, %4 : vector<2x32xf32>
    %6 = arith.mulf %0, %5 : vector<2x32xf32>
    %c0_1 = arith.constant 0 : index
    %c0_2 = arith.constant 0 : index
    %7 = vector.load %arg2[%c0_1, %c0_2] : memref<768x32xf32, #tpu.memory_space<vmem>>, vector<768x32xf32>
    %cst_3 = arith.constant dense<0.000000e+00> : vector<2x768xf32>
    %8 = tpu.matmul %6, %7, %cst_3 {dimension_numbers = #tpu.dot_dimension_numbers<[1], [1], [0], [0], [0, 0, 1, 0], [], []>} : vector<2x32xf32>, vector<768x32xf32>, vector<2x768xf32> -> vector<2x768xf32>
    %c0_4 = arith.constant 0 : index
    %c0_5 = arith.constant 0 : index
    %9 = vector.load %arg3[%c0_4, %c0_5] : memref<1x768xf32, #tpu.memory_space<vmem>>, vector<1x768xf32>
    %10 = vector.broadcast %9 : vector<1x768xf32> to vector<2x768xf32>
    %11 = arith.addf %8, %10 : vector<2x768xf32>
    %c0_6 = arith.constant 0 : index
    %c0_7 = arith.constant 0 : index
    %12 = vector.load %arg4[%c0_6, %c0_7] : memref<2x768xf32, #tpu.memory_space<vmem>>, vector<2x768xf32>
    tpu.vector_store %arg4[%c0_6, %c0_7], %11 {strides = array<i32>} : memref<2x768xf32, #tpu.memory_space<vmem>>, vector<2x768xf32>,
    return
  }
  func.func @transform_0(%arg0: i32) -> (i32, i32) {
    %c0_i32 = arith.constant 0 : i32
    %c0_i32_0 = arith.constant 0 : i32
    %c0_i32_1 = arith.constant 0 : i32
    return %c0_i32, %c0_i32_0 : i32, i32
  }
  func.func @transform_1(%arg0: i32) -> (i32, i32) {
    %c0_i32 = arith.constant 0 : i32
    %c0_i32_0 = arith.constant 0 : i32
    return %arg0, %c0_i32 : i32, i32
  }
  func.func @transform_2(%arg0: i32) -> (i32, i32) {
    %c0_i32 = arith.constant 0 : i32
    %c0_i32_0 = arith.constant 0 : i32
    return %c0_i32, %arg0 : i32, i32
  }
  func.func @transform_3(%arg0: i32) -> (i32, i32) {
    %c0_i32 = arith.constant 0 : i32
    %c0_i32_0 = arith.constant 0 : i32
    return %c0_i32, %arg0 : i32, i32
  }
}

</mosaic_0001>

<llo_original>
// kernel: tpu_custom_call.1
$region0: #{tpu_custom_call.1}
  #allocation0 [shape = 'u32[]', space=smem, size = 0x4, offset = 0x4, fixed_abs, tag = 'smem constant byte address 0x4 - core index']
  #allocation1 [shape = 'u32[144,128]{1,0:T(1,128)}', space=vmem, size = 0x12000, scoped, tag = 'internal scratch']
  %s0 = inlined_call_operand.vmem [shape: f32[2,32], index: 0, kind: input, shape index: {}]
  %s1 = inlined_call_operand.vmem [shape: f32[768,32], index: 1, kind: input, shape index: {}]
  %s2 = inlined_call_operand.vmem [shape: f32[1,768], index: 2, kind: input, shape index: {}]
  %s3 = inlined_call_operand.hbm [shape: f32[2,768], index: 3, kind: output, shape index: {}]
  %s4 = sld [smem:[#allocation0]]
  $region22: #{tpu_custom_call.1} parent=0
    _
  %s6 = ssub.s32 1, %s4
  %s7 = scalar_select 0, %s6, %s4
  $region1: #{tpu_custom_call.1} parent=0
    #allocation2 [shape = 'u8[6144]{0}', space=vmem, size = 0x1800, scoped, tag = 'output window, operand 0, single buffered']
    #allocation3 [shape = 's32[1]{0}', space=sflag, size = 0x4, scoped, tag = 'scoped memory for tpu_custom_call.1']
    %8 = vsyncpa [#allocation3], 0
    // Predicated region
    $region2: #{tpu_custom_call.1} parent=1 // pred_check
      _
    $region3: #{tpu_custom_call.1} parent=1 // pred_check_branch
      %10 = sbr.rel (0) target = $region5
    $region4: #{tpu_custom_call.1} parent=1 // pred_region
      _
    $region5: #{tpu_custom_call.1} parent=1 // pred_fallthru
      _
    // Predicated region
    $region6: #{tpu_custom_call.1} parent=1 // pred_check
      _
    $region7: #{tpu_custom_call.1} parent=1 // pred_check_branch
      %12 = sbr.rel (0) target = $region9
    $region8: #{tpu_custom_call.1} parent=1 // pred_region
      _
    $region9: #{tpu_custom_call.1} parent=1 // pred_fallthru
      _
    // Predicated region
    $region10: #{tpu_custom_call.1} parent=1 // pred_check
      _
    $region11: #{tpu_custom_call.1} parent=1 // pred_check_branch
      %14 = sbr.rel (0) target = $region13
    $region12: #{tpu_custom_call.1} parent=1 // pred_region
      _
    $region13: #{tpu_custom_call.1} parent=1 // pred_fallthru
      _
    %v15 = vld [vmem:[%s0] sm:$0x3]
    %v16 = vxor.u32 %v15, 2147483648
    %v17 = vmul.f32 %v16, 1.442695
    %v18 = vpow.pop %v17
    %v19 = vadd.f32 %v18, 1.0
    %v20 = vrcp.pop %v19
    %v21 = vmul.f32 1.0, %v20
    %v22 = vmul.f32 %v15, %v21
    %v23 = vld [vmem:[%s1] sm:$0xff]
    %v24 = vld [vmem:[%s1 + $0x8] sm:$0xff]
    %v25 = vld [vmem:[%s1 + $0x10] sm:$0xff]
    %v26 = vld [vmem:[%s1 + $0x18] sm:$0xff]
    %v27 = vld [vmem:[%s1 + $0x20] sm:$0xff]
    %v28 = vld [vmem:[%s1 + $0x28] sm:$0xff]
    %v29 = vld [vmem:[%s1 + $0x30] sm:$0xff]
    %v30 = vld [vmem:[%s1 + $0x38] sm:$0xff]
    %v31 = vld [vmem:[%s1 + $0x40] sm:$0xff]
    %v32 = vld [vmem:[%s1 + $0x48] sm:$0xff]
    %v33 = vld [vmem:[%s1 + $0x50] sm:$0xff]
    %v34 = vld [vmem:[%s1 + $0x58] sm:$0xff]
    %v35 = vld [vmem:[%s1 + $0x60] sm:$0xff]
    %v36 = vld [vmem:[%s1 + $0x68] sm:$0xff]
    %v37 = vld [vmem:[%s1 + $0x70] sm:$0xff]
    %v38 = vld [vmem:[%s1 + $0x78] sm:$0xff]
    %v39 = vld [vmem:[%s1 + $0x80] sm:$0xff]
    %v40 = vld [vmem:[%s1 + $0x88] sm:$0xff]
    %v41 = vld [vmem:[%s1 + $0x90] sm:$0xff]
    %v42 = vld [vmem:[%s1 + $0x98] sm:$0xff]
    %v43 = vld [vmem:[%s1 + $0xa0] sm:$0xff]
    %v44 = vld [vmem:[%s1 + $0xa8] sm:$0xff]
    %v45 = vld [vmem:[%s1 + $0xb0] sm:$0xff]
    %v46 = vld [vmem:[%s1 + $0xb8] sm:$0xff]
    %v47 = vld [vmem:[%s1 + $0xc0] sm:$0xff]
    %v48 = vld [vmem:[%s1 + $0xc8] sm:$0xff]
    %v49 = vld [vmem:[%s1 + $0xd0] sm:$0xff]
    %v50 = vld [vmem:[%s1 + $0xd8] sm:$0xff]
    %v51 = vld [vmem:[%s1 + $0xe0] sm:$0xff]
    %v52 = vld [vmem:[%s1 + $0xe8] sm:$0xff]
    %v53 = vld [vmem:[%s1 + $0xf0] sm:$0xff]
    %v54 = vld [vmem:[%s1 + $0xf8] sm:$0xff]
    %v55 = vld [vmem:[%s1 + $0x100] sm:$0xff]
    %v56 = vld [vmem:[%s1 + $0x108] sm:$0xff]
    %v57 = vld [vmem:[%s1 + $0x110] sm:$0xff]
    %v58 = vld [vmem:[%s1 + $0x118] sm:$0xff]
    %v59 = vld [vmem:[%s1 + $0x120] sm:$0xff]
    %v60 = vld [vmem:[%s1 + $0x128] sm:$0xff]
    %v61 = vld [vmem:[%s1 + $0x130] sm:$0xff]
    %v62 = vld [vmem:[%s1 + $0x138] sm:$0xff]
    %v63 = vld [vmem:[%s1 + $0x140] sm:$0xff]
    %v64 = vld [vmem:[%s1 + $0x148] sm:$0xff]
    %v65 = vld [vmem:[%s1 + $0x150] sm:$0xff]
    %v66 = vld [vmem:[%s1 + $0x158] sm:$0xff]
    %v67 = vld [vmem:[%s1 + $0x160] sm:$0xff]
    %v68 = vld [vmem:[%s1 + $0x168] sm:$0xff]
    %v69 = vld [vmem:[%s1 + $0x170] sm:$0xff]
    %v70 = vld [vmem:[%s1 + $0x178] sm:$0xff]
    %v71 = vld [vmem:[%s1 + $0x180] sm:$0xff]
    %v72 = vld [vmem:[%s1 + $0x188] sm:$0xff]
    %v73 = vld [vmem:[%s1 + $0x190] sm:$0xff]
    %v74 = vld [vmem:[%s1 + $0x198] sm:$0xff]
    %v75 = vld [vmem:[%s1 + $0x1a0] sm:$0xff]
    %v76 = vld [vmem:[%s1 + $0x1a8] sm:$0xff]
    %v77 = vld [vmem:[%s1 + $0x1b0] sm:$0xff]
    %v78 = vld [vmem:[%s1 + $0x1b8] sm:$0xff]
    %v79 = vld [vmem:[%s1 + $0x1c0] sm:$0xff]
    %v80 = vld [vmem:[%s1 + $0x1c8] sm:$0xff]
    %v81 = vld [vmem:[%s1 + $0x1d0] sm:$0xff]
    %v82 = vld [vmem:[%s1 + $0x1d8] sm:$0xff]
    %v83 = vld [vmem:[%s1 + $0x1e0] sm:$0xff]
    %v84 = vld [vmem:[%s1 + $0x1e8] sm:$0xff]
    %v85 = vld [vmem:[%s1 + $0x1f0] sm:$0xff]
    %v86 = vld [vmem:[%s1 + $0x1f8] sm:$0xff]
    %v87 = vld [vmem:[%s1 + $0x200] sm:$0xff]
    %v88 = vld [vmem:[%s1 + $0x208] sm:$0xff]
    %v89 = vld [vmem:[%s1 + $0x210] sm:$0xff]
    %v90 = vld [vmem:[%s1 + $0x218] sm:$0xff]
    %v91 = vld [vmem:[%s1 + $0x220] sm:$0xff]
    %v92 = vld [vmem:[%s1 + $0x228] sm:$0xff]
    %v93 = vld [vmem:[%s1 + $0x230] sm:$0xff]
    %v94 = vld [vmem:[%s1 + $0x238] sm:$0xff]
    %v95 = vld [vmem:[%s1 + $0x240] sm:$0xff]
    %v96 = vld [vmem:[%s1 + $0x248] sm:$0xff]
    %v97 = vld [vmem:[%s1 + $0x250] sm:$0xff]
    %v98 = vld [vmem:[%s1 + $0x258] sm:$0xff]
    %v99 = vld [vmem:[%s1 + $0x260] sm:$0xff]
    %v100 = vld [vmem:[%s1 + $0x268] sm:$0xff]
    %v101 = vld [vmem:[%s1 + $0x270] sm:$0xff]
    %v102 = vld [vmem:[%s1 + $0x278] sm:$0xff]
    %v103 = vld [vmem:[%s1 + $0x280] sm:$0xff]
    %v104 = vld [vmem:[%s1 + $0x288] sm:$0xff]
    %v105 = vld [vmem:[%s1 + $0x290] sm:$0xff]
    %v106 = vld [vmem:[%s1 + $0x298] sm:$0xff]
    %v107 = vld [vmem:[%s1 + $0x2a0] sm:$0xff]
    %v108 = vld [vmem:[%s1 + $0x2a8] sm:$0xff]
    %v109 = vld [vmem:[%s1 + $0x2b0] sm:$0xff]
    %v110 = vld [vmem:[%s1 + $0x2b8] sm:$0xff]
    %v111 = vld [vmem:[%s1 + $0x2c0] sm:$0xff]
    %v112 = vld [vmem:[%s1 + $0x2c8] sm:$0xff]
    %v113 = vld [vmem:[%s1 + $0x2d0] sm:$0xff]
    %v114 = vld [vmem:[%s1 + $0x2d8] sm:$0xff]
    %v115 = vld [vmem:[%s1 + $0x2e0] sm:$0xff]
    %v116 = vld [vmem:[%s1 + $0x2e8] sm:$0xff]
    %v117 = vld [vmem:[%s1 + $0x2f0] sm:$0xff]
    %v118 = vld [vmem:[%s1 + $0x2f8] sm:$0xff]
    %v119 = vld [vmem:[%s2] sm:$0x3f]
    %v121 = vlaneseq
    %v122 = vshrl.u32 %v121, 7
    %v123 = vsub.s32 0, %v122
    %v124 = vrot.slane %v119, %v123
    %v125 = vlaneseq
    %v126 = vshrl.u32 %v125, 7
    %v127 = vsub.s32 1, %v126
    %v128 = vrot.slane %v119, %v127
    %v129 = vlaneseq
    %v130 = vshrl.u32 %v129, 7
    %v131 = vsub.s32 2, %v130
    %v132 = vrot.slane %v119, %v131
    %v133 = vlaneseq
    %v134 = vshrl.u32 %v133, 7
    %v135 = vsub.s32 3, %v134
    %v136 = vrot.slane %v119, %v135
    %v137 = vlaneseq
    %v138 = vshrl.u32 %v137, 7
    %v139 = vsub.s32 4, %v138
    %v140 = vrot.slane %v119, %v139
    %v141 = vlaneseq
    %v142 = vshrl.u32 %v141, 7
    %v143 = vsub.s32 5, %v142
    %v144 = vrot.slane %v119, %v143
    %vm151 = vcmask 261120
    %v153 = vsel %vm151, %v22, 0
    %v156 = vsel %vm151, %v23, 0
    %v159 = vsel %vm151, %v24, 0
    %v162 = vsel %vm151, %v25, 0
    %v165 = vsel %vm151, %v26, 0
    %v168 = vsel %vm151, %v27, 0
    %v171 = vsel %vm151, %v28, 0
    %v174 = vsel %vm151, %v29, 0
    %v177 = vsel %vm151, %v30, 0
    %v180 = vsel %vm151, %v31, 0
    %v183 = vsel %vm151, %v32, 0
    %v186 = vsel %vm151, %v33, 0
    %v189 = vsel %vm151, %v34, 0
    %v192 = vsel %vm151, %v35, 0
    %v195 = vsel %vm151, %v36, 0
    %v198 = vsel %vm151, %v37, 0
    %v201 = vsel %vm151, %v38, 0
    %v204 = vsel %vm151, %v39, 0
    %v207 = vsel %vm151, %v40, 0
    %v210 = vsel %vm151, %v41, 0
    %v213 = vsel %vm151, %v42, 0
    %v216 = vsel %vm151, %v43, 0
    %v219 = vsel %vm151, %v44, 0
    %v222 = vsel %vm151, %v45, 0
    %v225 = vsel %vm151, %v46, 0
    %v228 = vsel %vm151, %v47, 0
    %v231 = vsel %vm151, %v48, 0
    %v234 = vsel %vm151, %v49, 0
    %v237 = vsel %vm151, %v50, 0
    %v240 = vsel %vm151, %v51, 0
    %v243 = vsel %vm151, %v52, 0
    %v246 = vsel %vm151, %v53, 0
    %v249 = vsel %vm151, %v54, 0
    %v252 = vsel %vm151, %v55, 0
    %v255 = vsel %vm151, %v56, 0
    %v258 = vsel %vm151, %v57, 0
    %v261 = vsel %vm151, %v58, 0
    %v264 = vsel %vm151, %v59, 0
    %v267 = vsel %vm151, %v60, 0
    %v270 = vsel %vm151, %v61, 0
    %v273 = vsel %vm151, %v62, 0
    %v276 = vsel %vm151, %v63, 0
    %v279 = vsel %vm151, %v64, 0
    %v282 = vsel %vm151, %v65, 0
    %v285 = vsel %vm151, %v66, 0
    %v288 = vsel %vm151, %v67, 0
    %v291 = vsel %vm151, %v68, 0
    %v294 = vsel %vm151, %v69, 0
    %v297 = vsel %vm151, %v70, 0
    %v300 = vsel %vm151, %v71, 0
    %v303 = vsel %vm151, %v72, 0
    %v306 = vsel %vm151, %v73, 0
    %v309 = vsel %vm151, %v74, 0
    %v312 = vsel %vm151, %v75, 0
    %v315 = vsel %vm151, %v76, 0
    %v318 = vsel %vm151, %v77, 0
    %v321 = vsel %vm151, %v78, 0
    %v324 = vsel %vm151, %v79, 0
    %v327 = vsel %vm151, %v80, 0
    %v330 = vsel %vm151, %v81, 0
    %v333 = vsel %vm151, %v82, 0
    %v336 = vsel %vm151, %v83, 0
    %v339 = vsel %vm151, %v84, 0
    %v342 = vsel %vm151, %v85, 0
    %v345 = vsel %vm151, %v86, 0
    %v348 = vsel %vm151, %v87, 0
    %v351 = vsel %vm151, %v88, 0
    %v354 = vsel %vm151, %v89, 0
    %v357 = vsel %vm151, %v90, 0
    %v360 = vsel %vm151, %v91, 0
    %v363 = vsel %vm151, %v92, 0
    %v366 = vsel %vm151, %v93, 0
    %v369 = vsel %vm151, %v94, 0
    %v372 = vsel %vm151, %v95, 0
    %v375 = vsel %vm151, %v96, 0
    %v378 = vsel %vm151, %v97, 0
    %v381 = vsel %vm151, %v98, 0
    %v384 = vsel %vm151, %v99, 0
    %v387 = vsel %vm151, %v100, 0
    %v390 = vsel %vm151, %v101, 0
    %v393 = vsel %vm151, %v102, 0
    %v396 = vsel %vm151, %v103, 0
    %v399 = vsel %vm151, %v104, 0
    %v402 = vsel %vm151, %v105, 0
    %v405 = vsel %vm151, %v106, 0
    %v408 = vsel %vm151, %v107, 0
    %v411 = vsel %vm151, %v108, 0
    %v414 = vsel %vm151, %v109, 0
    %v417 = vsel %vm151, %v110, 0
    %v420 = vsel %vm151, %v111, 0
    %v423 = vsel %vm151, %v112, 0
    %v426 = vsel %vm151, %v113, 0
    %v429 = vsel %vm151, %v114, 0
    %v432 = vsel %vm151, %v115, 0
    %v435 = vsel %vm151, %v116, 0
    %v438 = vsel %vm151, %v117, 0
    %v441 = vsel %vm151, %v118, 0
    %443 = vmatprep.subr.mxu0 0.0
    %444 = vmatpush1.xpose.msra.mxu0 %v156
    %445 = vmatprep.subr.mxu0 0.0
    %446 = vmatpush1.xpose.msra.mxu0 %v159
    %447 = vmatprep.subr.mxu0 0.0
    %448 = vmatpush1.xpose.msra.mxu0 %v162
    %449 = vmatprep.subr.mxu0 0.0
    %450 = vmatpush1.xpose.msra.mxu0 %v165
    %451 = vmatprep.subr.mxu0 0.0
    %452 = vmatpush1.xpose.msra.mxu0 %v168
    %453 = vmatprep.subr.mxu0 0.0
    %454 = vmatpush1.xpose.msra.mxu0 %v171
    %455 = vmatprep.subr.mxu0 0.0
    %456 = vmatpush1.xpose.msra.mxu0 %v174
    %457 = vmatprep.subr.mxu0 0.0
    %458 = vmatpush1.xpose.msra.mxu0 %v177
    %459 = vmatprep.subr.mxu0 0.0
    %460 = vmatpush1.xpose.msra.mxu0 %v180
    %461 = vmatprep.subr.mxu0 0.0
    %462 = vmatpush1.xpose.msra.mxu0 %v183
    %463 = vmatprep.subr.mxu0 0.0
    %464 = vmatpush1.xpose.msra.mxu0 %v186
    %465 = vmatprep.subr.mxu0 0.0
    %466 = vmatpush1.xpose.msra.mxu0 %v189
    %467 = vmatprep.subr.mxu0 0.0
    %468 = vmatpush1.xpose.msra.mxu0 %v192
    %469 = vmatprep.subr.mxu0 0.0
    %470 = vmatpush1.xpose.msra.mxu0 %v195
    %471 = vmatprep.subr.mxu0 0.0
    %472 = vmatpush1.xpose.msra.mxu0 %v198
    %473 = vmatprep.subr.mxu0 0.0
    %474 = vmatpush1.xpose.msra.mxu0 %v201
    %475 = vmatprep.subr.mxu0 0.0
    %476 = vmatpush1.xpose.msra.mxu0 %v204
    %477 = vmatprep.subr.mxu0 0.0
    %478 = vmatpush1.xpose.msra.mxu0 %v207
    %479 = vmatprep.subr.mxu0 0.0
    %480 = vmatpush1.xpose.msra.mxu0 %v210
    %481 = vmatprep.subr.mxu0 0.0
    %482 = vmatpush1.xpose.msra.mxu0 %v213
    %483 = vmatprep.subr.mxu0 0.0
    %484 = vmatpush1.xpose.msra.mxu0 %v216
    %485 = vmatprep.subr.mxu0 0.0
    %486 = vmatpush1.xpose.msra.mxu0 %v219
    %487 = vmatprep.subr.mxu0 0.0
    %488 = vmatpush1.xpose.msra.mxu0 %v222
    %489 = vmatprep.subr.mxu0 0.0
    %490 = vmatpush1.xpose.msra.mxu0 %v225
    %491 = vmatprep.subr.mxu0 0.0
    %492 = vmatpush1.xpose.msra.mxu0 %v228
    %493 = vmatprep.subr.mxu0 0.0
    %494 = vmatpush1.xpose.msra.mxu0 %v231
    %495 = vmatprep.subr.mxu0 0.0
    %496 = vmatpush1.xpose.msra.mxu0 %v234
    %497 = vmatprep.subr.mxu0 0.0
    %498 = vmatpush1.xpose.msra.mxu0 %v237
    %499 = vmatprep.subr.mxu0 0.0
    %500 = vmatpush1.xpose.msra.mxu0 %v240
    %501 = vmatprep.subr.mxu0 0.0
    %502 = vmatpush1.xpose.msra.mxu0 %v243
    %503 = vmatprep.subr.mxu0 0.0
    %504 = vmatpush1.xpose.msra.mxu0 %v246
    %505 = vmatprep.subr.mxu0 0.0
    %506 = vmatpush1.xpose.msra.mxu0 %v249
    %507 = vmatprep.mubr.f32.mxu0 0.0
    %508 = vmatmul.mubr.f32.gmra.mrb[0].mxu0 %v153
    %v509 = vpop.f32.mrb[0].mxu0
    %v510 = vadd.f32 %v124, %v509
    %v511 = vpop.f32.mrb[0].mxu0
    %v512 = vadd.f32 %v128, %v511
    %513 = vdwg.mxu0
    %514 = vmatprep.subr.mxu0 0.0
    %515 = vmatpush1.xpose.msra.mxu0 %v252
    %516 = vmatprep.subr.mxu0 0.0
    %517 = vmatpush1.xpose.msra.mxu0 %v255
    %518 = vmatprep.subr.mxu0 0.0
    %519 = vmatpush1.xpose.msra.mxu0 %v258
    %520 = vmatprep.subr.mxu0 0.0
    %521 = vmatpush1.xpose.msra.mxu0 %v261
    %522 = vmatprep.subr.mxu0 0.0
    %523 = vmatpush1.xpose.msra.mxu0 %v264
    %524 = vmatprep.subr.mxu0 0.0
    %525 = vmatpush1.xpose.msra.mxu0 %v267
    %526 = vmatprep.subr.mxu0 0.0
    %527 = vmatpush1.xpose.msra.mxu0 %v270
    %528 = vmatprep.subr.mxu0 0.0
    %529 = vmatpush1.xpose.msra.mxu0 %v273
    %530 = vmatprep.subr.mxu0 0.0
    %531 = vmatpush1.xpose.msra.mxu0 %v276
    %532 = vmatprep.subr.mxu0 0.0
    %533 = vmatpush1.xpose.msra.mxu0 %v279
    %534 = vmatprep.subr.mxu0 0.0
    %535 = vmatpush1.xpose.msra.mxu0 %v282
    %536 = vmatprep.subr.mxu0 0.0
    %537 = vmatpush1.xpose.msra.mxu0 %v285
    %538 = vmatprep.subr.mxu0 0.0
    %539 = vmatpush1.xpose.msra.mxu0 %v288
    %540 = vmatprep.subr.mxu0 0.0
    %541 = vmatpush1.xpose.msra.mxu0 %v291
    %542 = vmatprep.subr.mxu0 0.0
    %543 = vmatpush1.xpose.msra.mxu0 %v294
    %544 = vmatprep.subr.mxu0 0.0
    %545 = vmatpush1.xpose.msra.mxu0 %v297
    %546 = vmatprep.subr.mxu0 0.0
    %547 = vmatpush1.xpose.msra.mxu0 %v300
    %548 = vmatprep.subr.mxu0 0.0
    %549 = vmatpush1.xpose.msra.mxu0 %v303
    %550 = vmatprep.subr.mxu0 0.0
    %551 = vmatpush1.xpose.msra.mxu0 %v306
    %552 = vmatprep.subr.mxu0 0.0
    %553 = vmatpush1.xpose.msra.mxu0 %v309
    %554 = vmatprep.subr.mxu0 0.0
    %555 = vmatpush1.xpose.msra.mxu0 %v312
    %556 = vmatprep.subr.mxu0 0.0
    %557 = vmatpush1.xpose.msra.mxu0 %v315
    %558 = vmatprep.subr.mxu0 0.0
    %559 = vmatpush1.xpose.msra.mxu0 %v318
    %560 = vmatprep.subr.mxu0 0.0
    %561 = vmatpush1.xpose.msra.mxu0 %v321
    %562 = vmatprep.subr.mxu0 0.0
    %563 = vmatpush1.xpose.msra.mxu0 %v324
    %564 = vmatprep.subr.mxu0 0.0
    %565 = vmatpush1.xpose.msra.mxu0 %v327
    %566 = vmatprep.subr.mxu0 0.0
    %567 = vmatpush1.xpose.msra.mxu0 %v330
    %568 = vmatprep.subr.mxu0 0.0
    %569 = vmatpush1.xpose.msra.mxu0 %v333
    %570 = vmatprep.subr.mxu0 0.0
    %571 = vmatpush1.xpose.msra.mxu0 %v336
    %572 = vmatprep.subr.mxu0 0.0
    %573 = vmatpush1.xpose.msra.mxu0 %v339
    %574 = vmatprep.subr.mxu0 0.0
    %575 = vmatpush1.xpose.msra.mxu0 %v342
    %576 = vmatprep.subr.mxu0 0.0
    %577 = vmatpush1.xpose.msra.mxu0 %v345
    %578 = vmatprep.mubr.f32.mxu0 0.0
    %579 = vmatmul.mubr.f32.gmra.mrb[0].mxu0 %v153
    %v580 = vpop.f32.mrb[0].mxu0
    %v581 = vadd.f32 %v132, %v580
    %v582 = vpop.f32.mrb[0].mxu0
    %v583 = vadd.f32 %v136, %v582
    %584 = vdwg.mxu0
    %585 = vmatprep.subr.mxu0 0.0
    %586 = vmatpush1.xpose.msra.mxu0 %v348
    %587 = vmatprep.subr.mxu0 0.0
    %588 = vmatpush1.xpose.msra.mxu0 %v351
    %589 = vmatprep.subr.mxu0 0.0
    %590 = vmatpush1.xpose.msra.mxu0 %v354
    %591 = vmatprep.subr.mxu0 0.0
    %592 = vmatpush1.xpose.msra.mxu0 %v357
    %593 = vmatprep.subr.mxu0 0.0
    %594 = vmatpush1.xpose.msra.mxu0 %v360
    %595 = vmatprep.subr.mxu0 0.0
    %596 = vmatpush1.xpose.msra.mxu0 %v363
    %597 = vmatprep.subr.mxu0 0.0
    %598 = vmatpush1.xpose.msra.mxu0 %v366
    %599 = vmatprep.subr.mxu0 0.0
    %600 = vmatpush1.xpose.msra.mxu0 %v369
    %601 = vmatprep.subr.mxu0 0.0
    %602 = vmatpush1.xpose.msra.mxu0 %v372
    %603 = vmatprep.subr.mxu0 0.0
    %604 = vmatpush1.xpose.msra.mxu0 %v375
    %605 = vmatprep.subr.mxu0 0.0
    %606 = vmatpush1.xpose.msra.mxu0 %v378
    %607 = vmatprep.subr.mxu0 0.0
    %608 = vmatpush1.xpose.msra.mxu0 %v381
    %609 = vmatprep.subr.mxu0 0.0
    %610 = vmatpush1.xpose.msra.mxu0 %v384
    %611 = vmatprep.subr.mxu0 0.0
    %612 = vmatpush1.xpose.msra.mxu0 %v387
    %613 = vmatprep.subr.mxu0 0.0
    %614 = vmatpush1.xpose.msra.mxu0 %v390
    %615 = vmatprep.subr.mxu0 0.0
    %616 = vmatpush1.xpose.msra.mxu0 %v393
    %617 = vmatprep.subr.mxu0 0.0
    %618 = vmatpush1.xpose.msra.mxu0 %v396
    %619 = vmatprep.subr.mxu0 0.0
    %620 = vmatpush1.xpose.msra.mxu0 %v399
    %621 = vmatprep.subr.mxu0 0.0
    %622 = vmatpush1.xpose.msra.mxu0 %v402
    %623 = vmatprep.subr.mxu0 0.0
    %624 = vmatpush1.xpose.msra.mxu0 %v405
    %625 = vmatprep.subr.mxu0 0.0
    %626 = vmatpush1.xpose.msra.mxu0 %v408
    %627 = vmatprep.subr.mxu0 0.0
    %628 = vmatpush1.xpose.msra.mxu0 %v411
    %629 = vmatprep.subr.mxu0 0.0
    %630 = vmatpush1.xpose.msra.mxu0 %v414
    %631 = vmatprep.subr.mxu0 0.0
    %632 = vmatpush1.xpose.msra.mxu0 %v417
    %633 = vmatprep.subr.mxu0 0.0
    %634 = vmatpush1.xpose.msra.mxu0 %v420
    %635 = vmatprep.subr.mxu0 0.0
    %636 = vmatpush1.xpose.msra.mxu0 %v423
    %637 = vmatprep.subr.mxu0 0.0
    %638 = vmatpush1.xpose.msra.mxu0 %v426
    %639 = vmatprep.subr.mxu0 0.0
    %640 = vmatpush1.xpose.msra.mxu0 %v429
    %641 = vmatprep.subr.mxu0 0.0
    %642 = vmatpush1.xpose.msra.mxu0 %v432
    %643 = vmatprep.subr.mxu0 0.0
    %644 = vmatpush1.xpose.msra.mxu0 %v435
    %645 = vmatprep.subr.mxu0 0.0
    %646 = vmatpush1.xpose.msra.mxu0 %v438
    %647 = vmatprep.subr.mxu0 0.0
    %648 = vmatpush1.xpose.msra.mxu0 %v441
    %649 = vmatprep.mubr.f32.mxu0 0.0
    %650 = vmatmul.mubr.f32.gmra.mrb[0].mxu0 %v153
    %v651 = vpop.f32.mrb[0].mxu0
    %v652 = vadd.f32 %v140, %v651
    %v653 = vpop.f32.mrb[0].mxu0
    %v654 = vadd.f32 %v144, %v653
    %655 = vdwg.mxu0
    %v662 = vcombine.low %v510, %v512
    %v663 = vcombine.low %v581, %v583
    %v665 = vunpack.c.l.s4 1983009808
    %v666 = vunpack.c.0.s8 %v665
    %v667 = vlaneseq
    %v668 = vshrl.u32 %v667, 7
    %v669 = vsub.s32 %v666, %v668
    %v670 = vrot.slane %v662, %v669
    %v672 = vunpack.c.l.s4 1983009808
    %v673 = vunpack.c.0.s8 %v672
    %v674 = vlaneseq
    %v675 = vshrl.u32 %v674, 7
    %v676 = vsub.s32 %v673, %v675
    %v677 = vrot.slane %v663, %v676
    %v678 = vcombine.low %v670, %v677
    %v679 = vcombine.low %v652, %v654
    %v681 = vunpack.c.l.s4 1983009808
    %v682 = vunpack.c.0.s8 %v681
    %v683 = vlaneseq
    %v684 = vshrl.u32 %v683, 7
    %v685 = vsub.s32 %v682, %v684
    %v686 = vrot.slane %v679, %v685
    %689 = vst [vmem:[#allocation2] sm:$0xff] %v678
    %690 = vst [vmem:[#allocation2 + $0x8] sm:$0xf] %v686
    // Predicated region
    $region14: #{tpu_custom_call.1} parent=1 // pred_check
      _
    $region15: #{tpu_custom_call.1} parent=1 // pred_check_branch
      %692 = sbr.rel (0) target = $region17
    $region16: #{tpu_custom_call.1} parent=1 // pred_region
      %s694 = ssub.s32 192, 192
      %695 = vsyncadd [#allocation3], %s694
      %s697 = sshll.u32 [#allocation2], 4
      %s698 = int_to_ptr.vmem [resolvable:$true] %s697
      %700 = dma.vmem_to_hbm [thread:$0]  %s698, 192, %s3, [#allocation3]
    $region17: #{tpu_custom_call.1} parent=1 // pred_fallthru
      _
    // Predicated region
    $region18: #{tpu_custom_call.1} parent=1 // pred_check
      _
    $region19: #{tpu_custom_call.1} parent=1 // pred_check_branch
      %702 = sbr.rel (0) target = $region21
    $region20: #{tpu_custom_call.1} parent=1 // pred_region
      %703 = dma.done [#allocation3], 192
    $region21: #{tpu_custom_call.1} parent=1 // pred_fallthru
      _
    %704 = vsyncpa [#allocation3], 1

</llo_original>
